<compile_context>
chip_gen: v5e
topology: v5e:2x2
jax: 0.10.0
libtpu: 0.0.40
codegen_flags: <defaults>
</compile_context>

<pallas_src>
import functools

import numpy as np
import jax
import jax.numpy as jnp
from jax import lax
from jax.experimental import pallas as pl
from jax.experimental.pallas import tpu as pltpu

EPS = 1e-7
# -log(clamp(p, EPS, 1-EPS)) is equivalent to clamping the negative
# log-likelihood itself to [-log(1-EPS), -log(EPS)] (computed in f32 like the
# reference does).
_NLL_LO = float(-np.log(np.float32(1.0) - np.float32(EPS)))  # ~1.19e-7
_NLL_HI = float(-np.log(np.float32(EPS)))                    # ~16.118


def _softplus(x):
    # Stable softplus using only exp/log (both native single-slot EUP ops).
    return jnp.maximum(x, 0.0) + jnp.log(1.0 + jnp.exp(-jnp.abs(x)))


def _skipgram_fused_kernel(emb_tbl_ref, ffw_tbl_ref, inpt_ref, tr_ref, out_ref,
                           *, n_pos):
    # emb_tbl_ref: (VOC, E) embedding table, VMEM
    # ffw_tbl_ref: (VOC, E) linear weight,  VMEM
    # inpt_ref:    (B, 1)   int32 center-word indices, VMEM
    # tr_ref:      (T+R, 1) int32 concat(trgs, rand) indices, VMEM
    # out_ref:     (1, 1)   f32 scalar loss, SMEM
    voc = emb_tbl_ref.shape[0]
    tbl_dtype = emb_tbl_ref.dtype

    # ---- fused gathers: exact one-hot MXU matmuls over the VMEM tables ----
    b_ids = inpt_ref[...]                                          # (B, 1)
    b_hot = jnp.where(
        b_ids == lax.broadcasted_iota(jnp.int32, (b_ids.shape[0], voc), 1),
        1.0, 0.0).astype(tbl_dtype)                                # (B, VOC)
    emb = jnp.dot(b_hot, emb_tbl_ref[...],
                  preferred_element_type=jnp.float32)              # (B, E)

    tr_ids = tr_ref[...]                                           # (T+R, 1)
    tr_hot = jnp.where(
        tr_ids == lax.broadcasted_iota(jnp.int32, (tr_ids.shape[0], voc), 1),
        1.0, 0.0).astype(tbl_dtype)                                # (T+R, VOC)
    lhs = jnp.dot(tr_hot, ffw_tbl_ref[...],
                  preferred_element_type=jnp.float32)              # (T+R, E)

    # ---- single merged score matmul, contraction on native last dims ------
    scores = lax.dot_general(
        lhs, emb,
        dimension_numbers=(((1,), (1,)), ((), ())),
        preferred_element_type=jnp.float32)                        # (T+R, B)
    s_pos = scores[:n_pos, :]
    s_neg = scores[n_pos:, :]

    # ---- fused log-sigmoid with the reference's clamp semantics -----------
    # -log(clamp(sigmoid(s), eps, 1-eps))     == clip(softplus(-s), LO, HI)
    # -log(1 - clamp(sigmoid(s), eps, 1-eps)) == clip(softplus( s), LO, HI)
    nll_pos = jnp.clip(_softplus(-s_pos), _NLL_LO, _NLL_HI)
    nll_neg = jnp.clip(_softplus(s_neg), _NLL_LO, _NLL_HI)

    out_ref[0, 0] = jnp.mean(nll_pos) + jnp.mean(nll_neg)


def skipgram_forward(emb_weight, ffw_weight, inpt, trgs, rand):
    """Equivalent of SkipGramFoo.forward; returns the scalar f32 loss.

    emb_weight: (voc, emb)  Embedding table
    ffw_weight: (voc, emb)  Linear(emb -> voc, bias=False) weight
    inpt, trgs, rand: int index vectors
    """
    b = inpt.shape[0]
    t = trgs.shape[0]
    r = rand.shape[0]

    # Only tiny index plumbing stays in the wrapper (no data gathers).
    inpt2d = inpt.astype(jnp.int32).reshape(b, 1)
    tr2d = jnp.concatenate(
        [trgs.astype(jnp.int32), rand.astype(jnp.int32)]).reshape(t + r, 1)

    out = pl.pallas_call(
        functools.partial(_skipgram_fused_kernel, n_pos=t),
        out_shape=jax.ShapeDtypeStruct((1, 1), jnp.float32),
        in_specs=[
            pl.BlockSpec(memory_space=pltpu.VMEM),   # embedding table (VOC, E)
            pl.BlockSpec(memory_space=pltpu.VMEM),   # linear weight   (VOC, E)
            pl.BlockSpec(memory_space=pltpu.VMEM),   # center indices  (B, 1)
            pl.BlockSpec(memory_space=pltpu.VMEM),   # pos+neg indices (T+R, 1)
        ],
        out_specs=pl.BlockSpec(memory_space=pltpu.SMEM),
    )(emb_weight, ffw_weight, inpt2d, tr2d)
    return out[0, 0]


if __name__ == "__main__":
    # Small deterministic setup consistent with the module:
    VOC, EMB = 64, 32      # vocabulary size, embedding dim
    B, T, R = 8, 8, 8      # center words, positive targets, negative samples

    key = jax.random.PRNGKey(0)
    k_emb, k_ffw, k_i, k_t, k_r = jax.random.split(key, 5)

    # Deterministic parameter init (shapes match nn.Embedding / nn.Linear).
    emb_weight = jax.random.normal(k_emb, (VOC, EMB), dtype=jnp.float32)
    ffw_weight = (jax.random.uniform(k_ffw, (VOC, EMB), dtype=jnp.float32) - 0.5) * 0.2

    inpt = jax.random.randint(k_i, (B,), 0, VOC, dtype=jnp.int32)
    trgs = jax.random.randint(k_t, (T,), 0, VOC, dtype=jnp.int32)
    rand = jax.random.randint(k_r, (R,), 0, VOC, dtype=jnp.int32)

    loss = jax.jit(skipgram_forward)(emb_weight, ffw_weight, inpt, trgs, rand)
    jax.block_until_ready(loss)

    # Sanity check against a pure-JAX reference that mirrors the PyTorch math.
    def _ref(emb_w, ffw_w, i, t, r):
        e = emb_w[i]
        c = ffw_w[t]
        n = ffw_w[r]
        po = jnp.clip(jax.nn.sigmoid(c @ e.T), EPS, 1 - EPS)
        pn = jnp.clip(jax.nn.sigmoid(n @ e.T), EPS, 1 - EPS)
        return -jnp.mean(jnp.log(po)) - jnp.mean(jnp.log(1 - pn))

    ref = _ref(emb_weight, ffw_weight, inpt, trgs, rand)
    assert jnp.allclose(loss, ref, rtol=1e-5, atol=1e-5), (loss, ref)

    print("KERNEL_OK")
</pallas_src>

<mosaic_0001>
module attributes {stable_mosaic.version = 11 : i64} {
  func.func @_skipgram_fused_kernel(%arg0: memref<64x32xf32, #tpu.memory_space<vmem>>, %arg1: memref<64x32xf32, #tpu.memory_space<vmem>>, %arg2: memref<8x1xi32, #tpu.memory_space<vmem>>, %arg3: memref<16x1xi32, #tpu.memory_space<vmem>>, %arg4: memref<1x1xf32, #tpu.memory_space<smem>>) attributes {dimension_semantics = [], scalar_prefetch = 0 : i64, scratch_operands = 0 : i64, tpu.core_type = #tpu.core_type<tc>} {
    %c0 = arith.constant 0 : index
    %c0_0 = arith.constant 0 : index
    %0 = vector.load %arg2[%c0, %c0_0] : memref<8x1xi32, #tpu.memory_space<vmem>>, vector<8x1xi32>
    %1 = tpu.iota {dimensions = array<i32: 1>} : vector<8x64xi32>
    %2 = vector.broadcast %0 : vector<8x1xi32> to vector<8x64xi32>
    %3 = arith.cmpi eq, %2, %1 : vector<8x64xi32>
    %cst = arith.constant 1.000000e+00 : f32
    %cst_1 = arith.constant 0.000000e+00 : f32
    %4 = vector.broadcast %cst : f32 to vector<8x64xf32>
    %5 = vector.broadcast %cst_1 : f32 to vector<8x64xf32>
    %6 = arith.select %3, %4, %5 : vector<8x64xi1>, vector<8x64xf32>
    %c0_2 = arith.constant 0 : index
    %c0_3 = arith.constant 0 : index
    %7 = vector.load %arg0[%c0_2, %c0_3] : memref<64x32xf32, #tpu.memory_space<vmem>>, vector<64x32xf32>
    %cst_4 = arith.constant dense<0.000000e+00> : vector<8x32xf32>
    %8 = tpu.matmul %6, %7, %cst_4 {dimension_numbers = #tpu.dot_dimension_numbers<[1], [0], [0], [1], [0, 0, 1, 1], [], []>} : vector<8x64xf32>, vector<64x32xf32>, vector<8x32xf32> -> vector<8x32xf32>
    %c0_5 = arith.constant 0 : index
    %c0_6 = arith.constant 0 : index
    %9 = vector.load %arg3[%c0_5, %c0_6] : memref<16x1xi32, #tpu.memory_space<vmem>>, vector<16x1xi32>
    %10 = tpu.iota {dimensions = array<i32: 1>} : vector<16x64xi32>
    %11 = vector.broadcast %9 : vector<16x1xi32> to vector<16x64xi32>
    %12 = arith.cmpi eq, %11, %10 : vector<16x64xi32>
    %cst_7 = arith.constant 1.000000e+00 : f32
    %cst_8 = arith.constant 0.000000e+00 : f32
    %13 = vector.broadcast %cst_7 : f32 to vector<16x64xf32>
    %14 = vector.broadcast %cst_8 : f32 to vector<16x64xf32>
    %15 = arith.select %12, %13, %14 : vector<16x64xi1>, vector<16x64xf32>
    %c0_9 = arith.constant 0 : index
    %c0_10 = arith.constant 0 : index
    %16 = vector.load %arg1[%c0_9, %c0_10] : memref<64x32xf32, #tpu.memory_space<vmem>>, vector<64x32xf32>
    %cst_11 = arith.constant dense<0.000000e+00> : vector<16x32xf32>
    %17 = tpu.matmul %15, %16, %cst_11 {dimension_numbers = #tpu.dot_dimension_numbers<[1], [0], [0], [1], [0, 0, 1, 1], [], []>} : vector<16x64xf32>, vector<64x32xf32>, vector<16x32xf32> -> vector<16x32xf32>
    %cst_12 = arith.constant dense<0.000000e+00> : vector<16x8xf32>
    %18 = tpu.matmul %17, %8, %cst_12 {dimension_numbers = #tpu.dot_dimension_numbers<[1], [1], [0], [0], [0, 0, 1, 0], [], []>} : vector<16x32xf32>, vector<8x32xf32>, vector<16x8xf32> -> vector<16x8xf32>
    %19 = vector.extract_strided_slice %18 {offsets = [0, 0], sizes = [8, 8], strides = [1, 1]} : vector<16x8xf32> to vector<8x8xf32>
    %20 = vector.extract_strided_slice %18 {offsets = [8, 0], sizes = [8, 8], strides = [1, 1]} : vector<16x8xf32> to vector<8x8xf32>
    %cst_13 = arith.constant 0.000000e+00 : f32
    %21 = vector.broadcast %cst_13 : f32 to vector<8x8xf32>
    %22 = arith.subf %21, %19 : vector<8x8xf32>
    %cst_14 = arith.constant 0.000000e+00 : f32
    %23 = vector.broadcast %cst_14 : f32 to vector<8x8xf32>
    %24 = arith.maximumf %22, %23 : vector<8x8xf32>
    %25 = math.absf %22 : vector<8x8xf32>
    %cst_15 = arith.constant 0.000000e+00 : f32
    %26 = vector.broadcast %cst_15 : f32 to vector<8x8xf32>
    %27 = arith.subf %26, %25 : vector<8x8xf32>
    %28 = math.exp %27 : vector<8x8xf32>
    %cst_16 = arith.constant 1.000000e+00 : f32
    %29 = vector.broadcast %cst_16 : f32 to vector<8x8xf32>
    %30 = arith.addf %29, %28 : vector<8x8xf32>
    %31 = math.log %30 : vector<8x8xf32>
    %32 = arith.addf %24, %31 : vector<8x8xf32>
    %cst_17 = arith.constant 1.19209304E-7 : f32
    %cst_18 = arith.constant 16.1180954 : f32
    %33 = vector.broadcast %cst_17 : f32 to vector<8x8xf32>
    %34 = arith.maximumf %33, %32 : vector<8x8xf32>
    %35 = vector.broadcast %cst_18 : f32 to vector<8x8xf32>
    %36 = arith.minimumf %35, %34 : vector<8x8xf32>
    %cst_19 = arith.constant 0.000000e+00 : f32
    %37 = vector.broadcast %cst_19 : f32 to vector<8x8xf32>
    %38 = arith.maximumf %20, %37 : vector<8x8xf32>
    %39 = math.absf %20 : vector<8x8xf32>
    %cst_20 = arith.constant 0.000000e+00 : f32
    %40 = vector.broadcast %cst_20 : f32 to vector<8x8xf32>
    %41 = arith.subf %40, %39 : vector<8x8xf32>
    %42 = math.exp %41 : vector<8x8xf32>
    %cst_21 = arith.constant 1.000000e+00 : f32
    %43 = vector.broadcast %cst_21 : f32 to vector<8x8xf32>
    %44 = arith.addf %43, %42 : vector<8x8xf32>
    %45 = math.log %44 : vector<8x8xf32>
    %46 = arith.addf %38, %45 : vector<8x8xf32>
    %cst_22 = arith.constant 1.19209304E-7 : f32
    %cst_23 = arith.constant 16.1180954 : f32
    %47 = vector.broadcast %cst_22 : f32 to vector<8x8xf32>
    %48 = arith.maximumf %47, %46 : vector<8x8xf32>
    %49 = vector.broadcast %cst_23 : f32 to vector<8x8xf32>
    %50 = arith.minimumf %49, %48 : vector<8x8xf32>
    %51 = vector.shape_cast %36 : vector<8x8xf32> to vector<1x8x8xf32>
    %cst_24 = arith.constant dense<0.000000e+00> : vector<1xf32>
    %52 = vector.multi_reduction <add>, %51, %cst_24 [1, 2] : vector<1x8x8xf32> to vector<1xf32>
    %53 = vector.shape_cast %52 : vector<1xf32> to vector<1x1x1xf32>
    %54 = vector.extract %53[0, 0, 0] : f32 from vector<1x1x1xf32>
    %cst_25 = arith.constant 6.400000e+01 : f32
    %55 = arith.divf %54, %cst_25 : f32
    %56 = vector.shape_cast %50 : vector<8x8xf32> to vector<1x8x8xf32>
    %cst_26 = arith.constant dense<0.000000e+00> : vector<1xf32>
    %57 = vector.multi_reduction <add>, %56, %cst_26 [1, 2] : vector<1x8x8xf32> to vector<1xf32>
    %58 = vector.shape_cast %57 : vector<1xf32> to vector<1x1x1xf32>
    %59 = vector.extract %58[0, 0, 0] : f32 from vector<1x1x1xf32>
    %cst_27 = arith.constant 6.400000e+01 : f32
    %60 = arith.divf %59, %cst_27 : f32
    %61 = arith.addf %55, %60 : f32
    %c0_28 = arith.constant 0 : index
    %c0_29 = arith.constant 0 : index
    %62 = memref.load %arg4[%c0_28, %c0_29] : memref<1x1xf32, #tpu.memory_space<smem>>
    memref.store %61, %arg4[%c0_28, %c0_29] : memref<1x1xf32, #tpu.memory_space<smem>>
    return
  }
}

</mosaic_0001>

<llo_original>
// kernel: skipgram_forward.1
$region0: #{skipgram_forward.1}
  #allocation0 [shape = 'u32[]', space=smem, size = 0x4, offset = 0x4, fixed_abs, tag = 'smem constant byte address 0x4 - core index']
  #allocation1 [shape = 'u32[72,128]{1,0:T(1,128)}', space=vmem, size = 0x9000, scoped, tag = 'internal scratch']
  %s0 = inlined_call_operand.vmem [shape: f32[64,32], index: 0, kind: input, shape index: {}]
  %s1 = inlined_call_operand.vmem [shape: f32[64,32], index: 1, kind: input, shape index: {}]
  %s2 = inlined_call_operand.vmem [shape: s32[8,1], index: 2, kind: input, shape index: {}]
  %s3 = inlined_call_operand.vmem [shape: s32[16,1], index: 3, kind: input, shape index: {}]
  %s4 = inlined_call_operand.hbm [shape: f32[1,1], index: 4, kind: output, shape index: {}]
  %s5 = sld [smem:[#allocation0]]
  $region26: #{skipgram_forward.1} parent=0
    _
  %s7 = ssub.s32 1, %s5
  %s8 = scalar_select 0, %s7, %s5
  $region1: #{skipgram_forward.1} parent=0
    #allocation2 [shape = 'u8[512]{0}', space=smem, size = 0x200, scoped, tag = 'output window, operand 0, single buffered']
    #allocation3 [shape = 's32[1]{0}', space=sflag, size = 0x4, scoped, tag = 'scoped memory for skipgram_forward.1']
    %9 = vsyncpa [#allocation3], 0
    // Predicated region
    $region2: #{skipgram_forward.1} parent=1 // pred_check
      _
    $region3: #{skipgram_forward.1} parent=1 // pred_check_branch
      %11 = sbr.rel (0) target = $region5
    $region4: #{skipgram_forward.1} parent=1 // pred_region
      _
    $region5: #{skipgram_forward.1} parent=1 // pred_fallthru
      _
    // Predicated region
    $region6: #{skipgram_forward.1} parent=1 // pred_check
      _
    $region7: #{skipgram_forward.1} parent=1 // pred_check_branch
      %13 = sbr.rel (0) target = $region9
    $region8: #{skipgram_forward.1} parent=1 // pred_region
      _
    $region9: #{skipgram_forward.1} parent=1 // pred_fallthru
      _
    // Predicated region
    $region10: #{skipgram_forward.1} parent=1 // pred_check
      _
    $region11: #{skipgram_forward.1} parent=1 // pred_check_branch
      %15 = sbr.rel (0) target = $region13
    $region12: #{skipgram_forward.1} parent=1 // pred_region
      _
    $region13: #{skipgram_forward.1} parent=1 // pred_fallthru
      _
    // Predicated region
    $region14: #{skipgram_forward.1} parent=1 // pred_check
      _
    $region15: #{skipgram_forward.1} parent=1 // pred_check_branch
      %17 = sbr.rel (0) target = $region17
    $region16: #{skipgram_forward.1} parent=1 // pred_region
      _
    $region17: #{skipgram_forward.1} parent=1 // pred_fallthru
      _
    %v18 = vld [vmem:[%s2] sm:$0xff]
    %v19 = vlaneseq
    %v20 = vand.u32 %v19, 127
    %21 = vset.pattern.permute.xlu0 0
    %22 = vperm.xlu0 %21, %v18
    %v23 = vpop.permute.xlu0 %22
    %vm24 = vcmp.eq.s32.totalorder %v23, %v20
    %v25 = vsel %vm24, 1.0, 0.0
    %v26 = vld [vmem:[%s0] sm:$0xff]
    %v27 = vld [vmem:[%s0 + $0x8] sm:$0xff]
    %v28 = vld [vmem:[%s0 + $0x10] sm:$0xff]
    %v29 = vld [vmem:[%s0 + $0x18] sm:$0xff]
    %v30 = vld [vmem:[%s0 + $0x20] sm:$0xff]
    %v31 = vld [vmem:[%s0 + $0x28] sm:$0xff]
    %v32 = vld [vmem:[%s0 + $0x30] sm:$0xff]
    %v33 = vld [vmem:[%s0 + $0x38] sm:$0xff]
    %vm34 = vcmask 523264
    %v36 = vsel %vm34, %v25, 0
    %38 = vmatpush.msra.mxu0 0.0
    %39 = vmatpush.msra.mxu0 0.0
    %40 = vmatpush.msra.mxu0 0.0
    %41 = vmatpush.msra.mxu0 0.0
    %42 = vmatpush.msra.mxu0 0.0
    %43 = vmatpush.msra.mxu0 0.0
    %44 = vmatpush.msra.mxu0 0.0
    %45 = vmatpush.msra.mxu0 0.0
    %46 = vmatpush.msra.mxu0 %v33
    %47 = vmatpush.msra.mxu0 %v32
    %48 = vmatpush.msra.mxu0 %v31
    %49 = vmatpush.msra.mxu0 %v30
    %50 = vmatpush.msra.mxu0 %v29
    %51 = vmatpush.msra.mxu0 %v28
    %52 = vmatpush.msra.mxu0 %v27
    %53 = vmatpush.msra.mxu0 %v26
    %54 = vmatmul.f32.gmra.mxu0 %v36
    %v55 = vpop.f32.mrf.mxu0
    %v56 = vadd.f32 0.0, %v55
    %57 = vdwg.mxu0
    %v58 = vld [vmem:[%s3] sm:$0xff]
    %v59 = vld [vmem:[%s3 + $0x8] sm:$0xff]
    %60 = vset.pattern.permute.xlu0 0
    %61 = vperm.xlu0 %60, %v58
    %v62 = vpop.permute.xlu0 %61
    %63 = vset.pattern.permute.xlu0 0
    %64 = vperm.xlu0 %63, %v59
    %v65 = vpop.permute.xlu0 %64
    %vm66 = vcmp.eq.s32.totalorder %v62, %v20
    %vm67 = vcmp.eq.s32.totalorder %v65, %v20
    %v68 = vsel %vm66, 1.0, 0.0
    %v69 = vsel %vm67, 1.0, 0.0
    %v70 = vld [vmem:[%s1] sm:$0xff]
    %v71 = vld [vmem:[%s1 + $0x8] sm:$0xff]
    %v72 = vld [vmem:[%s1 + $0x10] sm:$0xff]
    %v73 = vld [vmem:[%s1 + $0x18] sm:$0xff]
    %v74 = vld [vmem:[%s1 + $0x20] sm:$0xff]
    %v75 = vld [vmem:[%s1 + $0x28] sm:$0xff]
    %v76 = vld [vmem:[%s1 + $0x30] sm:$0xff]
    %v77 = vld [vmem:[%s1 + $0x38] sm:$0xff]
    %v79 = vsel %vm34, %v68, 0
    %v82 = vsel %vm34, %v69, 0
    %84 = vmatpush.msra.mxu0 0.0
    %85 = vmatpush.msra.mxu0 0.0
    %86 = vmatpush.msra.mxu0 0.0
    %87 = vmatpush.msra.mxu0 0.0
    %88 = vmatpush.msra.mxu0 0.0
    %89 = vmatpush.msra.mxu0 0.0
    %90 = vmatpush.msra.mxu0 0.0
    %91 = vmatpush.msra.mxu0 0.0
    %92 = vmatpush.msra.mxu0 %v77
    %93 = vmatpush.msra.mxu0 %v76
    %94 = vmatpush.msra.mxu0 %v75
    %95 = vmatpush.msra.mxu0 %v74
    %96 = vmatpush.msra.mxu0 %v73
    %97 = vmatpush.msra.mxu0 %v72
    %98 = vmatpush.msra.mxu0 %v71
    %99 = vmatpush.msra.mxu0 %v70
    %100 = vmatmul.f32.gmra.mxu0 %v79
    %v101 = vpop.f32.mrf.mxu0
    %v102 = vadd.f32 0.0, %v101
    %103 = vmatmul.f32.gmra.mxu0 %v82
    %v104 = vpop.f32.mrf.mxu0
    %v105 = vadd.f32 0.0, %v104
    %106 = vdwg.mxu0
    %vm107 = vcmask 261120
    %v109 = vsel %vm107, %v102, 0
    %v112 = vsel %vm107, %v105, 0
    %v115 = vsel %vm107, %v56, 0
    %117 = vmatpush.xpose.msra.mxu0 0.0
    %118 = vmatpush.xpose.msra.mxu0 0.0
    %119 = vmatpush.xpose.msra.mxu0 0.0
    %120 = vmatpush.xpose.msra.mxu0 0.0
    %121 = vmatpush.xpose.msra.mxu0 0.0
    %122 = vmatpush.xpose.msra.mxu0 0.0
    %123 = vmatpush.xpose.msra.mxu0 0.0
    %124 = vmatpush.xpose.msra.mxu0 0.0
    %125 = vmatpush.xpose.msra.mxu0 0.0
    %126 = vmatpush.xpose.msra.mxu0 0.0
    %127 = vmatpush.xpose.msra.mxu0 0.0
    %128 = vmatpush.xpose.msra.mxu0 0.0
    %129 = vmatpush.xpose.msra.mxu0 0.0
    %130 = vmatpush.xpose.msra.mxu0 0.0
    %131 = vmatpush.xpose.msra.mxu0 0.0
    %132 = vmatpush.xpose.msra.mxu0 %v115
    %133 = vmatmul.f32.gmra.mxu0 %v109
    %v134 = vpop.f32.mrf.mxu0
    %v135 = vadd.f32 0.0, %v134
    %136 = vmatmul.f32.gmra.mxu0 %v112
    %v137 = vpop.f32.mrf.mxu0
    %v138 = vadd.f32 0.0, %v137
    %139 = vdwg.mxu0
    %v140 = vsub.f32 0.0, %v135
    %v141 = vmax.f32 %v140, 0.0
    %v142 = vand.u32 2147483647, %v140
    %v143 = vsub.f32 0.0, %v142
    %v144 = vmul.f32 %v143, 1.442695
    %v145 = vpow.pop %v144
    %v146 = vadd.f32 %v145, 1.0
    %v147 = vlog2.pop %v146
    %v148 = vmul.f32 %v147, 0.6931472
    %v149 = vadd.f32 %v141, %v148
    %v150 = vmax.f32 %v149, 1.192093e-07
    %v151 = vmin.f32 %v150, 16.118095
    %v152 = vmax.f32 %v138, 0.0
    %v153 = vand.u32 2147483647, %v138
    %v154 = vsub.f32 0.0, %v153
    %v155 = vmul.f32 %v154, 1.442695
    %v156 = vpow.pop %v155
    %v157 = vadd.f32 %v156, 1.0
    %v158 = vlog2.pop %v157
    %v159 = vmul.f32 %v158, 0.6931472
    %v160 = vadd.f32 %v152, %v159
    %v161 = vmax.f32 %v160, 1.192093e-07
    %v162 = vmin.f32 %v161, 16.118095
    %vm163 = vcmask 64512
    %v164 = vsel %vm163, %v151, 0.0
    %165 = vadd.xlane.f32.xlu0 %v164
    %v166 = vpop.xlane.xlu0 %165
    %v167 = vrot.slane %v166, 4
    %v168 = vadd.f32 %v166, %v167
    %v169 = vrot.slane %v168, 2
    %v170 = vadd.f32 %v168, %v169
    %v171 = vrot.slane %v170, 1
    %v172 = vadd.f32 %v170, %v171
    %s173 = vtos %v172
    %v174 = vrcp.pop 64.0
    %v175 = vmul.f32 64.0, %v174
    %v176 = vsub.f32 1.0, %v175
    %v177 = vmul.f32 %v174, %v176
    %v178 = vadd.f32 %v174, %v177
    %vm179 = vweird.f32 %v174
    %v180 = vsel %vm179, %v174, %v178
    %s181 = vtos %v180
    %s182 = smul.f32 %s173, %s181
    %v183 = vsel %vm163, %v162, 0.0
    %184 = vadd.xlane.f32.xlu0 %v183
    %v185 = vpop.xlane.xlu0 %184
    %v186 = vrot.slane %v185, 4
    %v187 = vadd.f32 %v185, %v186
    %v188 = vrot.slane %v187, 2
    %v189 = vadd.f32 %v187, %v188
    %v190 = vrot.slane %v189, 1
    %v191 = vadd.f32 %v189, %v190
    %s192 = vtos %v191
    %v193 = vrcp.pop 64.0
    %v194 = vmul.f32 64.0, %v193
    %v195 = vsub.f32 1.0, %v194
    %v196 = vmul.f32 %v193, %v195
    %v197 = vadd.f32 %v193, %v196
    %vm198 = vweird.f32 %v193
    %v199 = vsel %vm198, %v193, %v197
    %s200 = vtos %v199
    %s201 = smul.f32 %s192, %s200
    %s202 = sadd.f32 %s182, %s201
    %s203 = scalar_lea.smem [#allocation2], 0
    %204 = sst [smem:[%s203]] %s202
    // Predicated region
    $region18: #{skipgram_forward.1} parent=1 // pred_check
      _
    $region19: #{skipgram_forward.1} parent=1 // pred_check_branch
      %206 = sbr.rel (0) target = $region21
    $region20: #{skipgram_forward.1} parent=1 // pred_region
      %208 = vsyncadd [#allocation3], 0
      %s210 = sshll.u32 %s4, 4
      %s211 = int_to_ptr.hbm [resolvable:$true] %s210
      %213 = dma.smem_to_hbm [#allocation2], 16, %s211, [#allocation3]
    $region21: #{skipgram_forward.1} parent=1 // pred_fallthru
      _
    // Predicated region
    $region22: #{skipgram_forward.1} parent=1 // pred_check
      _
    $region23: #{skipgram_forward.1} parent=1 // pred_check_branch
      %215 = sbr.rel (0) target = $region25
    $region24: #{skipgram_forward.1} parent=1 // pred_region
      %217 = dma.done [#allocation3], 16
    $region25: #{skipgram_forward.1} parent=1 // pred_fallthru
      _
    %218 = sfence
    %219 = vsyncpa [#allocation3], 1

</llo_original>
